<compile_context>
chip_gen: v5e
topology: v5e:2x2
jax: 0.10.0
libtpu: 0.0.40
codegen_flags: <defaults>
</compile_context>

<pallas_src>
import jax
import jax.numpy as jnp
from jax.experimental import pallas as pl
from jax.experimental.pallas import tpu as pltpu


def _avg_kernel(x1_ref, x2_ref, o_ref):
    # elementwise hot path on the whole VMEM tile: (x1 + x2) / 2
    o_ref[...] = ((x1_ref[...] + x2_ref[...]) * 0.5).astype(o_ref.dtype)


def direct_update(x1: jax.Array, x2: jax.Array) -> jax.Array:
    """Pallas equivalent of directupdate.forward: (x1 + x2) / 2."""
    assert x1.shape == x2.shape and x1.dtype == x2.dtype
    orig_shape = x1.shape
    dtype = x1.dtype
    n = x1.size

    itemsize = jnp.dtype(dtype).itemsize
    # Native packed sublane multiple: 8 for f32, 16 for bf16, 32 for int8/fp8.
    sublane = max(8, 32 // itemsize)
    # Wide lane-dense last dim (multiple of 128) -> unmasked full-vreg stores.
    lane = 1024

    # Rows needed to cover n elements at `lane` per row.
    rows = pl.cdiv(n, lane)

    # Target ~2 MiB per operand per grid step: big enough to hit the HBM
    # roofline on v5e/v6e/v7x, small enough that 3 arrays x 2 buffers fits the
    # default scoped VMEM on every generation (and leaves v7x megacore room).
    target_tile_bytes = 2 * 1024 * 1024
    max_tile_rows = max(
        sublane, (target_tile_bytes // (lane * itemsize)) // sublane * sublane
    )
    rows_rounded = ((rows + sublane - 1) // sublane) * sublane
    tile_rows = min(max_tile_rows, rows_rounded)

    # Pad rows up to a multiple of the tile (zeros -> (0+0)/2 = 0, sliced off).
    padded_rows = ((rows + tile_rows - 1) // tile_rows) * tile_rows
    padded_n = padded_rows * lane

    x1f = jnp.pad(x1.reshape(-1), (0, padded_n - n)).reshape(padded_rows, lane)
    x2f = jnp.pad(x2.reshape(-1), (0, padded_n - n)).reshape(padded_rows, lane)

    grid = (padded_rows // tile_rows,)
    spec = pl.BlockSpec((tile_rows, lane), lambda i: (i, 0))

    # Explicit VMEM budget: 3 arrays x 2 buffers x tile + headroom.
    tile_bytes = tile_rows * lane * itemsize
    vmem_limit = min(3 * 2 * tile_bytes + (4 << 20), 64 << 20)

    out = pl.pallas_call(
        _avg_kernel,
        out_shape=jax.ShapeDtypeStruct((padded_rows, lane), dtype),
        grid_spec=pltpu.PrefetchScalarGridSpec(
            num_scalar_prefetch=0,
            grid=grid,
            in_specs=[spec, spec],
            out_specs=spec,
        ),
        compiler_params=pltpu.CompilerParams(
            dimension_semantics=("parallel",),
            vmem_limit_bytes=vmem_limit,
        ),
    )(x1f, x2f)

    return out.reshape(-1)[:n].reshape(orig_shape)


if __name__ == "__main__":
    # directupdate(dim) has no parameters; `dim` only records channel count.
    dim = 4
    key = jax.random.PRNGKey(0)
    k1, k2 = jax.random.split(key)

    # NCHW inputs consistent with a template-update module: (B, C, H, W)
    x1 = jax.random.normal(k1, (2, dim, 16, 16), dtype=jnp.float32)
    x2 = jax.random.normal(k2, (2, dim, 16, 16), dtype=jnp.float32)

    out = direct_update(x1, x2)
    out = jax.block_until_ready(out)

    ref = (x1 + x2) / 2
    assert out.shape == ref.shape
    assert jnp.allclose(out, ref, atol=1e-6), "mismatch vs reference"
    print("KERNEL_OK")
</pallas_src>

<mosaic_0001>
module attributes {stable_mosaic.version = 11 : i64} {
  func.func @_avg_kernel(%arg0: i32, %arg1: memref<8x1024xf32, #tpu.memory_space<vmem>>, %arg2: memref<8x1024xf32, #tpu.memory_space<vmem>>, %arg3: memref<8x1024xf32, #tpu.memory_space<vmem>>) attributes {dimension_semantics = [#tpu.dimension_semantics<parallel>], iteration_bounds = array<i64: 1>, scalar_prefetch = 0 : i64, scratch_operands = 0 : i64, tpu.core_type = #tpu.core_type<tc>, window_params = [{transform_indices = @transform_0, window_bounds = array<i64: 8, 1024>}, {transform_indices = @transform_1, window_bounds = array<i64: 8, 1024>}, {transform_indices = @transform_2, window_bounds = array<i64: 8, 1024>}]} {
    %c0 = arith.constant 0 : index
    %c0_0 = arith.constant 0 : index
    %0 = vector.load %arg1[%c0, %c0_0] : memref<8x1024xf32, #tpu.memory_space<vmem>>, vector<8x1024xf32>
    %c0_1 = arith.constant 0 : index
    %c0_2 = arith.constant 0 : index
    %1 = vector.load %arg2[%c0_1, %c0_2] : memref<8x1024xf32, #tpu.memory_space<vmem>>, vector<8x1024xf32>
    %2 = arith.addf %0, %1 : vector<8x1024xf32>
    %cst = arith.constant 5.000000e-01 : f32
    %3 = vector.broadcast %cst : f32 to vector<8x1024xf32>
    %4 = arith.mulf %2, %3 : vector<8x1024xf32>
    %c0_3 = arith.constant 0 : index
    %c0_4 = arith.constant 0 : index
    %5 = vector.load %arg3[%c0_3, %c0_4] : memref<8x1024xf32, #tpu.memory_space<vmem>>, vector<8x1024xf32>
    tpu.vector_store %arg3[%c0_3, %c0_4], %4 {strides = array<i32>} : memref<8x1024xf32, #tpu.memory_space<vmem>>, vector<8x1024xf32>,
    return
  }
  func.func @transform_0(%arg0: i32) -> (i32, i32) {
    %c0_i32 = arith.constant 0 : i32
    %c0_i32_0 = arith.constant 0 : i32
    return %arg0, %c0_i32 : i32, i32
  }
  func.func @transform_1(%arg0: i32) -> (i32, i32) {
    %c0_i32 = arith.constant 0 : i32
    %c0_i32_0 = arith.constant 0 : i32
    return %arg0, %c0_i32 : i32, i32
  }
  func.func @transform_2(%arg0: i32) -> (i32, i32) {
    %c0_i32 = arith.constant 0 : i32
    %c0_i32_0 = arith.constant 0 : i32
    return %arg0, %c0_i32 : i32, i32
  }
}

</mosaic_0001>

<llo_original>
// kernel: tpu_custom_call.1
$region0: #{tpu_custom_call.1}
  #allocation0 [shape = 'u32[]', space=smem, size = 0x4, offset = 0x4, fixed_abs, tag = 'smem constant byte address 0x4 - core index']
  #allocation1 [shape = 'u32[72,128]{1,0:T(1,128)}', space=vmem, size = 0x9000, scoped, tag = 'internal scratch']
  %s0 = inlined_call_operand.hbm [shape: f32[8,1024], index: 0, kind: input, shape index: {}]
  %s1 = inlined_call_operand.hbm [shape: f32[8,1024], index: 1, kind: input, shape index: {}]
  %s2 = inlined_call_operand.hbm [shape: f32[8,1024], index: 2, kind: output, shape index: {}]
  %s3 = sld [smem:[#allocation0]]
  $region26: #{tpu_custom_call.1} parent=0
    _
  %s5 = ssub.s32 1, %s3
  %s6 = scalar_select 0, %s5, %s3
  $region1: #{tpu_custom_call.1} parent=0
    #allocation2 [shape = 'u8[32768]{0}', space=vmem, size = 0x8000, scoped, tag = 'input window, operand 0, single buffered']
    #allocation3 [shape = 's32[1]{0}', space=sflag, size = 0x4, scoped, tag = 'scoped memory for tpu_custom_call.1']
    #allocation4 [shape = 's32[1]{0}', space=sflag, size = 0x4, scoped, tag = 'scoped memory for tpu_custom_call.1']
    #allocation5 [shape = 'u8[32768]{0}', space=vmem, size = 0x8000, scoped, tag = 'input window, operand 1, single buffered']
    #allocation6 [shape = 's32[1]{0}', space=sflag, size = 0x4, scoped, tag = 'scoped memory for tpu_custom_call.1']
    #allocation7 [shape = 'u8[32768]{0}', space=vmem, size = 0x8000, scoped, tag = 'output window, operand 0, single buffered']
    %7 = vsyncpa [#allocation3], 0
    %8 = vsyncpa [#allocation6], 0
    %9 = vsyncpa [#allocation4], 0
    // Predicated region
    $region2: #{tpu_custom_call.1} parent=1 // pred_check
      _
    $region3: #{tpu_custom_call.1} parent=1 // pred_check_branch
      %11 = sbr.rel (0) target = $region5
    $region4: #{tpu_custom_call.1} parent=1 // pred_region
      %13 = vsyncadd [#allocation3], 0
      %s15 = sshll.u32 %s0, 4
      %s16 = int_to_ptr.hbm [resolvable:$true] %s15
      %s17 = sshll.u32 [#allocation2], 4
      %s18 = int_to_ptr.vmem [resolvable:$true] %s17
      %20 = dma.hbm_to_vmem [thread:$0]  %s16, 1024, %s18, [#allocation3]
    $region5: #{tpu_custom_call.1} parent=1 // pred_fallthru
      _
    // Predicated region
    $region6: #{tpu_custom_call.1} parent=1 // pred_check
      _
    $region7: #{tpu_custom_call.1} parent=1 // pred_check_branch
      %22 = sbr.rel (0) target = $region9
    $region8: #{tpu_custom_call.1} parent=1 // pred_region
      %24 = vsyncadd [#allocation6], 0
      %s26 = sshll.u32 %s1, 4
      %s27 = int_to_ptr.hbm [resolvable:$true] %s26
      %s28 = sshll.u32 [#allocation5], 4
      %s29 = int_to_ptr.vmem [resolvable:$true] %s28
      %31 = dma.hbm_to_vmem [thread:$0]  %s27, 1024, %s29, [#allocation6]
    $region9: #{tpu_custom_call.1} parent=1 // pred_fallthru
      _
    // Predicated region
    $region10: #{tpu_custom_call.1} parent=1 // pred_check
      _
    $region11: #{tpu_custom_call.1} parent=1 // pred_check_branch
      %33 = sbr.rel (0) target = $region13
    $region12: #{tpu_custom_call.1} parent=1 // pred_region
      %35 = dma.done [#allocation3], 1024
    $region13: #{tpu_custom_call.1} parent=1 // pred_fallthru
      _
    // Predicated region
    $region14: #{tpu_custom_call.1} parent=1 // pred_check
      _
    $region15: #{tpu_custom_call.1} parent=1 // pred_check_branch
      %37 = sbr.rel (0) target = $region17
    $region16: #{tpu_custom_call.1} parent=1 // pred_region
      %39 = dma.done [#allocation6], 1024
    $region17: #{tpu_custom_call.1} parent=1 // pred_fallthru
      _
    %v40 = vld [vmem:[#allocation2] sm:$0xff]
    %v41 = vld [vmem:[#allocation2 + $0x8] sm:$0xff]
    %v42 = vld [vmem:[#allocation2 + $0x10] sm:$0xff]
    %v43 = vld [vmem:[#allocation2 + $0x18] sm:$0xff]
    %v44 = vld [vmem:[#allocation2 + $0x20] sm:$0xff]
    %v45 = vld [vmem:[#allocation2 + $0x28] sm:$0xff]
    %v46 = vld [vmem:[#allocation2 + $0x30] sm:$0xff]
    %v47 = vld [vmem:[#allocation2 + $0x38] sm:$0xff]
    %v48 = vld [vmem:[#allocation5] sm:$0xff]
    %v49 = vld [vmem:[#allocation5 + $0x8] sm:$0xff]
    %v50 = vld [vmem:[#allocation5 + $0x10] sm:$0xff]
    %v51 = vld [vmem:[#allocation5 + $0x18] sm:$0xff]
    %v52 = vld [vmem:[#allocation5 + $0x20] sm:$0xff]
    %v53 = vld [vmem:[#allocation5 + $0x28] sm:$0xff]
    %v54 = vld [vmem:[#allocation5 + $0x30] sm:$0xff]
    %v55 = vld [vmem:[#allocation5 + $0x38] sm:$0xff]
    %v56 = vadd.f32 %v40, %v48
    %v57 = vadd.f32 %v41, %v49
    %v58 = vadd.f32 %v42, %v50
    %v59 = vadd.f32 %v43, %v51
    %v60 = vadd.f32 %v44, %v52
    %v61 = vadd.f32 %v45, %v53
    %v62 = vadd.f32 %v46, %v54
    %v63 = vadd.f32 %v47, %v55
    %v64 = vmul.f32 %v56, 0.5
    %v65 = vmul.f32 %v57, 0.5
    %v66 = vmul.f32 %v58, 0.5
    %v67 = vmul.f32 %v59, 0.5
    %v68 = vmul.f32 %v60, 0.5
    %v69 = vmul.f32 %v61, 0.5
    %v70 = vmul.f32 %v62, 0.5
    %v71 = vmul.f32 %v63, 0.5
    %72 = vst [vmem:[#allocation7] sm:$0xff] %v64
    %73 = vst [vmem:[#allocation7 + $0x8] sm:$0xff] %v65
    %74 = vst [vmem:[#allocation7 + $0x10] sm:$0xff] %v66
    %75 = vst [vmem:[#allocation7 + $0x18] sm:$0xff] %v67
    %76 = vst [vmem:[#allocation7 + $0x20] sm:$0xff] %v68
    %77 = vst [vmem:[#allocation7 + $0x28] sm:$0xff] %v69
    %78 = vst [vmem:[#allocation7 + $0x30] sm:$0xff] %v70
    %79 = vst [vmem:[#allocation7 + $0x38] sm:$0xff] %v71
    // Predicated region
    $region18: #{tpu_custom_call.1} parent=1 // pred_check
      _
    $region19: #{tpu_custom_call.1} parent=1 // pred_check_branch
      %81 = sbr.rel (0) target = $region21
    $region20: #{tpu_custom_call.1} parent=1 // pred_region
      %83 = vsyncadd [#allocation4], 0
      %s85 = sshll.u32 [#allocation7], 4
      %s86 = int_to_ptr.vmem [resolvable:$true] %s85
      %s87 = sshll.u32 %s2, 4
      %s88 = int_to_ptr.hbm [resolvable:$true] %s87
      %90 = dma.vmem_to_hbm [thread:$0]  %s86, 1024, %s88, [#allocation4]
    $region21: #{tpu_custom_call.1} parent=1 // pred_fallthru
      _
    // Predicated region
    $region22: #{tpu_custom_call.1} parent=1 // pred_check
      _
    $region23: #{tpu_custom_call.1} parent=1 // pred_check_branch
      %92 = sbr.rel (0) target = $region25
    $region24: #{tpu_custom_call.1} parent=1 // pred_region
      %94 = dma.done [#allocation4], 1024
    $region25: #{tpu_custom_call.1} parent=1 // pred_fallthru
      _
    %95 = vsyncpa [#allocation3], 1
    %96 = vsyncpa [#allocation6], 1
    %97 = vsyncpa [#allocation4], 1

</llo_original>
